<compile_context>
chip_gen: v7x
topology: tpu7x:2x2x1
jax: 0.10.0
libtpu: 0.0.40
codegen_flags: <defaults>
</compile_context>

<pallas_src>
import jax
import jax.numpy as jnp
from jax import lax
from jax.experimental import pallas as pl
from jax.experimental.pallas import tpu as pltpu


def _round_up(x, m):
    return (x + m - 1) // m * m


# ----------------------------- Pallas kernel ------------------------------- #

def _patch_embed_kernel(x_ref, w_ref, b_ref, o_ref):
    """One M-tile of the patch-embedding GEMM with fused bias epilogue.

    x_ref: (TM, K)  patch rows of this tile            (bf16 or f32)
    w_ref: (K,  Ep) full projection weight (VMEM-resident, constant index_map)
    b_ref: (1,  Ep) bias row (f32)
    o_ref: (TM, Ep) output tile — written exactly once, lane-dense.
    """
    acc = jnp.dot(x_ref[...], w_ref[...], preferred_element_type=jnp.float32)
    o_ref[...] = (acc + b_ref[...].astype(jnp.float32)).astype(o_ref.dtype)


def _patch_matmul(x_mat, w_mat, b_row, *, tm, out_dtype, vmem_limit_bytes):
    M, K = x_mat.shape
    _, Ep = w_mat.shape
    grid = (M // tm,)
    return pl.pallas_call(
        _patch_embed_kernel,
        out_shape=jax.ShapeDtypeStruct((M, Ep), out_dtype),
        grid_spec=pltpu.PrefetchScalarGridSpec(
            num_scalar_prefetch=0,
            grid=grid,
            in_specs=[
                # x streamed exactly once over M (single HBM pass).
                pl.BlockSpec((tm, K), lambda i: (i, 0)),
                # weight & bias: constant block index -> fetched once, resident.
                pl.BlockSpec((K, Ep), lambda i: (0, 0)),
                pl.BlockSpec((1, Ep), lambda i: (0, 0)),
            ],
            out_specs=pl.BlockSpec((tm, Ep), lambda i: (i, 0)),
        ),
        compiler_params=pltpu.CompilerParams(
            # M tiles are independent -> megacore shards them across TCs (v7x).
            dimension_semantics=("parallel",),
            vmem_limit_bytes=vmem_limit_bytes,
        ),
    )(x_mat, w_mat, b_row)


# ------------------------------- wrapper ------------------------------------ #

def patch_embed_forward(x, proj_w, proj_b, *, use_bf16=True):
    """Pallas equivalent of PatchEmbed.forward (Conv3d with stride == kernel).

    x:      (B, C, T, H, W)
    proj_w: (E, C, kt, ph, pw)   (PyTorch Conv3d weight layout)
    proj_b: (E,)
    returns (B, E, T//kt, H//ph, W//pw)

    use_bf16=True feeds the MXU bf16 operands with f32 accumulation (default,
    per perf review).  Pass use_bf16=False for exact f32 Conv3d parity.
    """
    B, C, T, H, W = x.shape
    E, C2, kt, ph, pw = proj_w.shape
    assert C == C2, "in_chans mismatch"
    assert T % kt == 0 and H % ph == 0 and W % pw == 0, \
        "input must be divisible by (tubelet, patch, patch)"
    To, Ho, Wo = T // kt, H // ph, W // pw
    out_dtype = x.dtype

    if use_bf16:
        # Cast BEFORE patchify so the wrapper-side transpose moves half the bytes.
        x = x.astype(jnp.bfloat16)
        proj_w = proj_w.astype(jnp.bfloat16)

    # --- patchify: layout plumbing in XLA (not a rectangular tile) -----------
    xp = x.reshape(B, C, To, kt, Ho, ph, Wo, pw)
    xp = xp.transpose(0, 2, 4, 6, 1, 3, 5, 7)          # (B,To,Ho,Wo, C,kt,ph,pw)
    M = B * To * Ho * Wo
    K = C * kt * ph * pw
    x_mat = xp.reshape(M, K)
    w_mat = proj_w.reshape(E, K).T                      # (K, E); ordering (c,dt,dh,dw)
    b_row = proj_b.reshape(1, E).astype(jnp.float32)    # epilogue bias stays f32

    # --- tile selection -------------------------------------------------------
    sub = 16 if use_bf16 else 8                          # bf16 packs 2 rows/sublane
    tm = min(512, _round_up(M, sub))
    # v7x has 2 TensorCores: keep >= 2 grid steps when M allows.
    if _round_up(M, sub) // tm < 2 and M >= 2 * sub:
        tm = _round_up(-(-M // 2), sub)

    Ep = _round_up(E, 128)                               # lane-dense output stores

    x_item = jnp.dtype(x_mat.dtype).itemsize
    o_item = jnp.dtype(out_dtype).itemsize

    def _vmem_bytes(tm_):
        return (2 * tm_ * K * x_item          # x tile, double-buffered
                + 2 * K * Ep * x_item         # resident weight (2 bufs allocated)
                + 2 * Ep * 4                  # bias
                + 2 * tm_ * Ep * o_item)      # output tile

    budget = 48 << 20                          # fits v7x's 64 MiB VMEM per TC
    while _vmem_bytes(tm) > budget and tm > sub:
        tm = max(sub, _round_up(tm // 2, sub))
    # TODO(synk): if K*Ep weights ever exceed the VMEM budget, fall back to a
    # K-tiled accumulator grid; not needed for ViT-scale patch embeds.

    Mp = _round_up(M, tm)
    if Mp != M:
        x_mat = jnp.pad(x_mat, ((0, Mp - M), (0, 0)))
    if Ep != E:
        w_mat = jnp.pad(w_mat, ((0, 0), (0, Ep - E)))
        b_row = jnp.pad(b_row, ((0, 0), (0, Ep - E)))

    vmem_limit = int(min(56 << 20, max(32 << 20, int(_vmem_bytes(tm) * 1.25))))

    out = _patch_matmul(x_mat, w_mat, b_row, tm=tm, out_dtype=out_dtype,
                        vmem_limit_bytes=vmem_limit)
    out = out[:M, :E]

    # (M, E) -> (B, To, Ho, Wo, E) -> (B, E, To, Ho, Wo)  (matches Conv3d output).
    # Downstream consumers that accept (B, L, E) tokens could skip this transpose.
    return out.reshape(B, To, Ho, Wo, E).transpose(0, 4, 1, 2, 3)


# ----------------------------- reference check ------------------------------ #

def patch_embed_ref(x, proj_w, proj_b):
    E = proj_w.shape[0]
    kt, ph, pw = proj_w.shape[2:]
    y = lax.conv_general_dilated(
        x, proj_w, window_strides=(kt, ph, pw), padding="VALID",
        dimension_numbers=("NCDHW", "OIDHW", "NCDHW"),
    )
    return y + proj_b.reshape(1, E, 1, 1, 1)


if __name__ == "__main__":
    # Small but representative shapes: B=2, C=3, T=4 (tubelet 2), 32x32 image,
    # 16x16 patches, embed_dim=256  ->  K = 3*2*16*16 = 1536, M = 16 patches.
    B, C, T, H, W = 2, 3, 4, 32, 32
    patch, tubelet, embed_dim = 16, 2, 256

    key = jax.random.PRNGKey(0)
    kx, kw, kb = jax.random.split(key, 3)
    K = C * tubelet * patch * patch

    x = jax.random.normal(kx, (B, C, T, H, W), dtype=jnp.float32)
    proj_w = jax.random.normal(
        kw, (embed_dim, C, tubelet, patch, patch), dtype=jnp.float32
    ) / jnp.sqrt(K)
    proj_b = 0.02 * jax.random.normal(kb, (embed_dim,), dtype=jnp.float32)

    ref = patch_embed_ref(x, proj_w, proj_b)

    # Exact f32 path (bit-for-bit semantics of the PyTorch module).
    out_f32 = patch_embed_forward(x, proj_w, proj_b, use_bf16=False)
    jax.block_until_ready(out_f32)
    assert out_f32.shape == ref.shape == (
        B, embed_dim, T // tubelet, H // patch, W // patch)
    assert jnp.allclose(out_f32, ref, atol=1e-3, rtol=1e-3)

    # Default fast path: bf16 operands on the MXU, f32 accumulation.
    out_bf16 = patch_embed_forward(x, proj_w, proj_b)
    jax.block_until_ready(out_bf16)
    assert out_bf16.shape == ref.shape
    assert jnp.allclose(out_bf16, ref, atol=5e-2, rtol=5e-2)

    print("KERNEL_OK")
</pallas_src>

<mosaic_0001>
module attributes {stable_mosaic.version = 11 : i64} {
  func.func @_patch_embed_kernel(%arg0: i32, %arg1: memref<8x1536xf32, #tpu.memory_space<vmem>>, %arg2: memref<1536x256xf32, #tpu.memory_space<vmem>>, %arg3: memref<1x256xf32, #tpu.memory_space<vmem>>, %arg4: memref<8x256xf32, #tpu.memory_space<vmem>>) attributes {dimension_semantics = [#tpu.dimension_semantics<parallel>], iteration_bounds = array<i64: 2>, scalar_prefetch = 0 : i64, scratch_operands = 0 : i64, tpu.core_type = #tpu.core_type<tc>, window_params = [{transform_indices = @transform_0, window_bounds = array<i64: 8, 1536>}, {pipeline_mode = #tpu.pipeline_mode<synchronous>, transform_indices = @transform_1, window_bounds = array<i64: 1536, 256>}, {pipeline_mode = #tpu.pipeline_mode<synchronous>, transform_indices = @transform_2, window_bounds = array<i64: 1, 256>}, {transform_indices = @transform_3, window_bounds = array<i64: 8, 256>}]} {
    %c0 = arith.constant 0 : index
    %c0_0 = arith.constant 0 : index
    %0 = vector.load %arg1[%c0, %c0_0] : memref<8x1536xf32, #tpu.memory_space<vmem>>, vector<8x1536xf32>
    %c0_1 = arith.constant 0 : index
    %c0_2 = arith.constant 0 : index
    %1 = vector.load %arg2[%c0_1, %c0_2] : memref<1536x256xf32, #tpu.memory_space<vmem>>, vector<1536x256xf32>
    %cst = arith.constant dense<0.000000e+00> : vector<8x256xf32>
    %2 = tpu.matmul %0, %1, %cst {dimension_numbers = #tpu.dot_dimension_numbers<[1], [0], [0], [1], [0, 0, 1, 1], [], []>} : vector<8x1536xf32>, vector<1536x256xf32>, vector<8x256xf32> -> vector<8x256xf32>
    %c0_3 = arith.constant 0 : index
    %c0_4 = arith.constant 0 : index
    %3 = vector.load %arg3[%c0_3, %c0_4] : memref<1x256xf32, #tpu.memory_space<vmem>>, vector<1x256xf32>
    %4 = vector.broadcast %3 : vector<1x256xf32> to vector<8x256xf32>
    %5 = arith.addf %2, %4 : vector<8x256xf32>
    %c0_5 = arith.constant 0 : index
    %c0_6 = arith.constant 0 : index
    %6 = vector.load %arg4[%c0_5, %c0_6] : memref<8x256xf32, #tpu.memory_space<vmem>>, vector<8x256xf32>
    tpu.vector_store %arg4[%c0_5, %c0_6], %5 {strides = array<i32>} : memref<8x256xf32, #tpu.memory_space<vmem>>, vector<8x256xf32>,
    return
  }
  func.func @transform_0(%arg0: i32) -> (i32, i32) {
    %c0_i32 = arith.constant 0 : i32
    %c0_i32_0 = arith.constant 0 : i32
    return %arg0, %c0_i32 : i32, i32
  }
  func.func @transform_1(%arg0: i32) -> (i32, i32) {
    %c0_i32 = arith.constant 0 : i32
    %c0_i32_0 = arith.constant 0 : i32
    %c0_i32_1 = arith.constant 0 : i32
    return %c0_i32, %c0_i32_0 : i32, i32
  }
  func.func @transform_2(%arg0: i32) -> (i32, i32) {
    %c0_i32 = arith.constant 0 : i32
    %c0_i32_0 = arith.constant 0 : i32
    %c0_i32_1 = arith.constant 0 : i32
    return %c0_i32, %c0_i32_0 : i32, i32
  }
  func.func @transform_3(%arg0: i32) -> (i32, i32) {
    %c0_i32 = arith.constant 0 : i32
    %c0_i32_0 = arith.constant 0 : i32
    return %arg0, %c0_i32 : i32, i32
  }
}

</mosaic_0001>

<llo_original>
// kernel: tpu_custom_call.1
$region0: #{tpu_custom_call.1}
  #allocation0 [shape = 'u32[]', space=smem, size = 0x4, offset = 0x4, fixed_abs, tag = 'smem constant byte address 0x4 - core index']
  #allocation1 [shape = 'u32[144,128]{1,0:T(1,128)}', space=vmem, size = 0x12000, scoped, tag = 'internal scratch']
  %s0 = inlined_call_operand.hbm [shape: f32[16,1536], index: 0, kind: input, shape index: {}]
  %s1 = inlined_call_operand.hbm [shape: f32[1536,256], index: 1, kind: input, shape index: {}]
  %s2 = inlined_call_operand.hbm [shape: f32[1,256], index: 2, kind: input, shape index: {}]
  %s3 = inlined_call_operand.hbm [shape: f32[16,256], index: 3, kind: output, shape index: {}]
  %s4 = sld [smem:[#allocation0]]
  $region57: #{tpu_custom_call.1} parent=0
    _
  %s6 = ssub.s32 1, %s4
  %s7 = scalar_select 0, %s6, %s4
  $region1: #{tpu_custom_call.1} parent=0
    #allocation2 [shape = 'u8[98304]{0}', space=vmem, size = 0x18000, scoped, tag = 'input window, operand 0']
    #allocation3 [shape = 's32[2]{0}', space=sflag, size = 0x8, scoped, tag = 'scoped memory for tpu_custom_call.1']
    #allocation4 [shape = 's32[2]{0}', space=sflag, size = 0x8, scoped, tag = 'scoped memory for tpu_custom_call.1']
    #allocation5 [shape = 'u8[1572864]{0}', space=vmem, size = 0x180000, scoped, tag = 'input window, operand 1, single buffered']
    #allocation6 [shape = 's32[1]{0}', space=sflag, size = 0x4, scoped, tag = 'scoped memory for tpu_custom_call.1']
    #allocation7 [shape = 'u8[1024]{0}', space=vmem, size = 0x400, scoped, tag = 'input window, operand 2, single buffered']
    #allocation8 [shape = 'u8[16384]{0}', space=vmem, size = 0x4000, scoped, tag = 'output window, operand 0']
    %8 = vsyncpa [#allocation3], 0
    %s9 = scalar_lea.sflag [#allocation3], 1
    %10 = vsyncpa %s9, 0
    %11 = vsyncpa [#allocation6], 0
    %12 = vsyncpa [#allocation4], 0
    %s13 = scalar_lea.sflag [#allocation4], 1
    %14 = vsyncpa %s13, 0
    loop: start=0, step=1, limit=4
    $region2: #{tpu_custom_call.1} parent=1 // loop_pre_header
      _
    $region3: #{tpu_custom_call.1} parent=1 // loop_header
      %s16 = sphi 0, %s20
      %p17 = scmp.ge.s32.totalorder %s16, 4
      %s26 = sphi 0, %s28
      %s29 = sphi 0, %s26
      %s30 = sphi 0, %s29
      %s46 = sphi 0, %s30
      %s50 = sphi 0, %s50
      %s52 = sphi 0, %s50
      %s53 = sphi 0, %s52
      %s67 = sphi 0, %s53
      %s71 = sphi 0, %s71
      %s73 = sphi 0, %s71
      %s74 = sphi 0, %s73
      %s88 = sphi 0, %s74
      %s94 = sphi 0, %s96
      %s97 = sphi 0, %s94
      %s98 = sphi 0, %s97
      %s114 = sphi 0, %s98
    $region4: #{tpu_custom_call.1} parent=1 // loop_header_branch
      %19 = sbr.rel (%p17) target = $region8
    $region5: #{tpu_custom_call.1} parent=1 // loop_body
      %s21 = ssub.s32 %s16, 1
      %s22 = ssub.s32 %s16, 2
      %s23 = sadd.s32 %s16, 1
      %s24 = ssub.s32 %s16, %s23
      %p25 = scmp.eq.s32.totalorder %s24, 0
      %s27 = sadd.s32 %s26, 1
      %s28 = scalar_select %p25, %s26, %s27
      %p31 = pneg %p25
      %p32 = scmp.eq.s32.totalorder %s16, 1
      %p33 = por %p31, %p32
      %p34 = scmp.ne.s32.totalorder %s26, %s29
      %p35 = scmp.eq.s32.totalorder %s16, 0
      %p36 = por %p34, %p35
      %p37 = scmp.ne.s32.totalorder %s26, %s29
      %p38 = scmp.eq.s32.totalorder %s21, 1
      %p39 = por %p37, %p38
      %p40 = scmp.ne.s32.totalorder %s29, %s30
      %p41 = scmp.eq.s32.totalorder %s21, 0
      %p42 = por %p40, %p41
      %p43 = scmp.ne.s32.totalorder %s29, %s30
      %p44 = scmp.eq.s32.totalorder %s22, 1
      %p45 = por %p43, %p44
      %p47 = scmp.ne.s32.totalorder %s30, %s46
      %p48 = scmp.eq.s32.totalorder %s22, 0
      %p49 = por %p47, %p48
      %s51 = sadd.s32 %s50, 1
      %p54 = scmp.eq.s32.totalorder %s16, 1
      %p55 = scmp.ne.s32.totalorder %s50, %s52
      %p56 = scmp.eq.s32.totalorder %s16, 0
      %p57 = por %p55, %p56
      %p58 = scmp.ne.s32.totalorder %s50, %s52
      %p59 = scmp.eq.s32.totalorder %s21, 1
      %p60 = por %p58, %p59
      %p61 = scmp.ne.s32.totalorder %s52, %s53
      %p62 = scmp.eq.s32.totalorder %s21, 0
      %p63 = por %p61, %p62
      %p64 = scmp.ne.s32.totalorder %s52, %s53
      %p65 = scmp.eq.s32.totalorder %s22, 1
      %p66 = por %p64, %p65
      %p68 = scmp.ne.s32.totalorder %s53, %s67
      %p69 = scmp.eq.s32.totalorder %s22, 0
      %p70 = por %p68, %p69
      %s72 = sadd.s32 %s71, 1
      %p75 = scmp.eq.s32.totalorder %s16, 1
      %p76 = scmp.ne.s32.totalorder %s71, %s73
      %p77 = scmp.eq.s32.totalorder %s16, 0
      %p78 = por %p76, %p77
      %p79 = scmp.ne.s32.totalorder %s71, %s73
      %p80 = scmp.eq.s32.totalorder %s21, 1
      %p81 = por %p79, %p80
      %p82 = scmp.ne.s32.totalorder %s73, %s74
      %p83 = scmp.eq.s32.totalorder %s21, 0
      %p84 = por %p82, %p83
      %p85 = scmp.ne.s32.totalorder %s73, %s74
      %p86 = scmp.eq.s32.totalorder %s22, 1
      %p87 = por %p85, %p86
      %p89 = scmp.ne.s32.totalorder %s74, %s88
      %p90 = scmp.eq.s32.totalorder %s22, 0
      %p91 = por %p89, %p90
      %s92 = ssub.s32 %s16, %s23
      %p93 = scmp.eq.s32.totalorder %s92, 0
      %s95 = sadd.s32 %s94, 1
      %s96 = scalar_select %p93, %s94, %s95
      %p99 = pneg %p93
      %p100 = scmp.eq.s32.totalorder %s16, 1
      %p101 = por %p99, %p100
      %p102 = scmp.ne.s32.totalorder %s94, %s97
      %p103 = scmp.eq.s32.totalorder %s16, 0
      %p104 = por %p102, %p103
      %p105 = scmp.ne.s32.totalorder %s94, %s97
      %p106 = scmp.eq.s32.totalorder %s21, 1
      %p107 = por %p105, %p106
      %p108 = scmp.ne.s32.totalorder %s97, %s98
      %p109 = scmp.eq.s32.totalorder %s21, 0
      %p110 = por %p108, %p109
      %p111 = scmp.ne.s32.totalorder %s97, %s98
      %p112 = scmp.eq.s32.totalorder %s22, 1
      %p113 = por %p111, %p112
      %p115 = scmp.ne.s32.totalorder %s98, %s114
      %p116 = scmp.eq.s32.totalorder %s22, 0
      %p117 = por %p115, %p116
      %p118 = scmp.le.s32.totalorder 1, %s16
      %p119 = scmp.lt.s32.totalorder %s16, 3
      %p120 = pnand %p118, %p119
      %p121 = pneg %p120
      // Predicated region
      $region9: #{tpu_custom_call.1} parent=5 // pred_check
        _
      $region10: #{tpu_custom_call.1} parent=5 // pred_check_branch
        %123 = sbr.rel (%p120) target = $region12
      $region11: #{tpu_custom_call.1} parent=5 // pred_region
        %s124 = ssub.s32 %s16, 1
        // Predicated region
        $region13: #{tpu_custom_call.1} parent=11 // pred_check
          %p125 = pneg %p63
        $region14: #{tpu_custom_call.1} parent=11 // pred_check_branch
          %127 = sbr.rel (%p125) target = $region16
        $region15: #{tpu_custom_call.1} parent=11 // pred_region
          %s129 = ssub.s32 49152, 49152
          %130 = vsyncadd [#allocation6], %s129
          %s131 = sshll.u32 [#allocation5], 4
          %s132 = int_to_ptr.vmem [resolvable:$true] %s131
          %137 = dma.hbm_to_vmem [thread:$0]  %s1, 49152, %s132, [#allocation6], 256, 256, 16
        $region16: #{tpu_custom_call.1} parent=11 // pred_fallthru
          _
        // Predicated region
        $region17: #{tpu_custom_call.1} parent=11 // pred_check
          %p138 = pneg %p84
        $region18: #{tpu_custom_call.1} parent=11 // pred_check_branch
          %140 = sbr.rel (%p138) target = $region20
        $region19: #{tpu_custom_call.1} parent=11 // pred_region
          %s142 = ssub.s32 32, 32
          %143 = vsyncadd [#allocation6], %s142
          %s145 = sshll.u32 [#allocation7], 4
          %s146 = int_to_ptr.vmem [resolvable:$true] %s145
          %148 = dma.hbm_to_vmem [thread:$0]  %s2, 32, %s146, [#allocation6]
        $region20: #{tpu_custom_call.1} parent=11 // pred_fallthru
          _
      $region12: #{tpu_custom_call.1} parent=5 // pred_fallthru
        _
      %p149 = scmp.lt.s32.totalorder %s16, 2
      // Predicated region
      $region21: #{tpu_custom_call.1} parent=5 // pred_check
        %p150 = pneg %p149
      $region22: #{tpu_custom_call.1} parent=5 // pred_check_branch
        %152 = sbr.rel (%p150) target = $region24
      $region23: #{tpu_custom_call.1} parent=5 // pred_region
        // Predicated region
        $region25: #{tpu_custom_call.1} parent=23 // pred_check
          %p153 = pneg %p36
        $region26: #{tpu_custom_call.1} parent=23 // pred_check_branch
          %155 = sbr.rel (%p153) target = $region28
        $region27: #{tpu_custom_call.1} parent=23 // pred_region
          %s156 = sand.u32 %s26, 1
          %s157 = scalar_lea.sflag [#allocation3], %s156
          %s158 = sand.u32 %s26, 1
          %s159 = smul.addr %s158, 96
          %s160 = scalar_lea.vmem [#allocation2], %s159
          %s162 = ssub.s32 1536, 1536
          %163 = vsyncadd %s157, %s162
          %s164 = smul.addr %s16, 12
          %s165 = smul.addr %s164, 128
          %s166 = scalar_lea.hbm %s0, %s165
          %s168 = sshll.u32 %s160, 4
          %s169 = int_to_ptr.vmem [resolvable:$true] %s168
          %171 = dma.hbm_to_vmem [thread:$0]  %s166, 1536, %s169, %s157
        $region28: #{tpu_custom_call.1} parent=23 // pred_fallthru
          _
      $region24: #{tpu_custom_call.1} parent=5 // pred_fallthru
        _
      %p172 = scmp.le.s32.totalorder 1, %s16
      %p173 = scmp.lt.s32.totalorder %s16, 3
      %p174 = pnand %p172, %p173
      %p175 = pneg %p174
      // Predicated region
      $region29: #{tpu_custom_call.1} parent=5 // pred_check
        _
      $region30: #{tpu_custom_call.1} parent=5 // pred_check_branch
        %177 = sbr.rel (%p174) target = $region32
      $region31: #{tpu_custom_call.1} parent=5 // pred_region
        %s178 = ssub.s32 %s16, 1
        %s179 = sand.u32 %s29, 1
        %s180 = scalar_lea.sflag [#allocation3], %s179
        %s181 = sand.u32 %s29, 1
        %s182 = smul.addr %s181, 96
        %s183 = scalar_lea.vmem [#allocation2], %s182
        // Predicated region
        $region33: #{tpu_custom_call.1} parent=31 // pred_check
          %p184 = pneg %p42
        $region34: #{tpu_custom_call.1} parent=31 // pred_check_branch
          %186 = sbr.rel (%p184) target = $region36
        $region35: #{tpu_custom_call.1} parent=31 // pred_region
          %187 = dma.done %s180, 1536
        $region36: #{tpu_custom_call.1} parent=31 // pred_fallthru
          _
        // Predicated region
        $region37: #{tpu_custom_call.1} parent=31 // pred_check
          %p188 = pneg %p63
        $region38: #{tpu_custom_call.1} parent=31 // pred_check_branch
          %190 = sbr.rel (%p188) target = $region40
        $region39: #{tpu_custom_call.1} parent=31 // pred_region
          %191 = dma.done [#allocation6], 49152
        $region40: #{tpu_custom_call.1} parent=31 // pred_fallthru
          _
        // Predicated region
        $region41: #{tpu_custom_call.1} parent=31 // pred_check
          %p192 = pneg %p84
        $region42: #{tpu_custom_call.1} parent=31 // pred_check_branch
          %194 = sbr.rel (%p192) target = $region44
        $region43: #{tpu_custom_call.1} parent=31 // pred_region
          %195 = dma.done [#allocation6], 32
        $region44: #{tpu_custom_call.1} parent=31 // pred_fallthru
          _
        %s196 = sand.u32 %s29, 1
        %s197 = scalar_lea.sflag [#allocation3], %s196
        %s198 = sand.u32 %s29, 1
        %s199 = smul.addr %s198, 96
        %s200 = scalar_lea.vmem [#allocation2], %s199
        %p201 = pneg %p42
        %p202 = pneg %p39
        %p203 = pneg %p63
        %p204 = pneg %p60
        %p205 = pneg %p84
        %p206 = pneg %p81
        %p207 = pneg %p110
        %p208 = pneg %p107
        %s209 = sand.u32 %s97, 1
        %s210 = scalar_lea.sflag [#allocation4], %s209
        %s211 = sand.u32 %s97, 1
        %s212 = smul.addr %s211, 16
        %s213 = scalar_lea.vmem [#allocation8], %s212
        %v214 = vld [vmem:[%s183] sm:$0xff]
        %v215 = vld [vmem:[%s183 + $0x8] sm:$0xff]
        %v216 = vld [vmem:[%s183 + $0x10] sm:$0xff]
        %v217 = vld [vmem:[%s183 + $0x18] sm:$0xff]
        %v218 = vld [vmem:[%s183 + $0x20] sm:$0xff]
        %v219 = vld [vmem:[%s183 + $0x28] sm:$0xff]
        %v220 = vld [vmem:[%s183 + $0x30] sm:$0xff]
        %v221 = vld [vmem:[%s183 + $0x38] sm:$0xff]
        %v222 = vld [vmem:[%s183 + $0x40] sm:$0xff]
        %v223 = vld [vmem:[%s183 + $0x48] sm:$0xff]
        %v224 = vld [vmem:[%s183 + $0x50] sm:$0xff]
        %v225 = vld [vmem:[%s183 + $0x58] sm:$0xff]
        %v226 = vld [vmem:[#allocation5] sm:$0xff]
        %v227 = vld [vmem:[#allocation5 + $0x8] sm:$0xff]
        %v228 = vld [vmem:[#allocation5 + $0x10] sm:$0xff]
        %v229 = vld [vmem:[#allocation5 + $0x18] sm:$0xff]
        %v230 = vld [vmem:[#allocation5 + $0x20] sm:$0xff]
        %v231 = vld [vmem:[#allocation5 + $0x28] sm:$0xff]
        %v232 = vld [vmem:[#allocation5 + $0x30] sm:$0xff]
        %v233 = vld [vmem:[#allocation5 + $0x38] sm:$0xff]
        %v234 = vld [vmem:[#allocation5 + $0x40] sm:$0xff]
        %v235 = vld [vmem:[#allocation5 + $0x48] sm:$0xff]
        %v236 = vld [vmem:[#allocation5 + $0x50] sm:$0xff]
        %v237 = vld [vmem:[#allocation5 + $0x58] sm:$0xff]
        %v238 = vld [vmem:[#allocation5 + $0x60] sm:$0xff]
        %v239 = vld [vmem:[#allocation5 + $0x68] sm:$0xff]
        %v240 = vld [vmem:[#allocation5 + $0x70] sm:$0xff]
        %v241 = vld [vmem:[#allocation5 + $0x78] sm:$0xff]
        %v242 = vld [vmem:[#allocation5 + $0x80] sm:$0xff]
        %v243 = vld [vmem:[#allocation5 + $0x88] sm:$0xff]
        %v244 = vld [vmem:[#allocation5 + $0x90] sm:$0xff]
        %v245 = vld [vmem:[#allocation5 + $0x98] sm:$0xff]
        %v246 = vld [vmem:[#allocation5 + $0xa0] sm:$0xff]
        %v247 = vld [vmem:[#allocation5 + $0xa8] sm:$0xff]
        %v248 = vld [vmem:[#allocation5 + $0xb0] sm:$0xff]
        %v249 = vld [vmem:[#allocation5 + $0xb8] sm:$0xff]
        %v250 = vld [vmem:[#allocation5 + $0xc0] sm:$0xff]
        %v251 = vld [vmem:[#allocation5 + $0xc8] sm:$0xff]
        %v252 = vld [vmem:[#allocation5 + $0xd0] sm:$0xff]
        %v253 = vld [vmem:[#allocation5 + $0xd8] sm:$0xff]
        %v254 = vld [vmem:[#allocation5 + $0xe0] sm:$0xff]
        %v255 = vld [vmem:[#allocation5 + $0xe8] sm:$0xff]
        %v256 = vld [vmem:[#allocation5 + $0xf0] sm:$0xff]
        %v257 = vld [vmem:[#allocation5 + $0xf8] sm:$0xff]
        %v258 = vld [vmem:[#allocation5 + $0x100] sm:$0xff]
        %v259 = vld [vmem:[#allocation5 + $0x108] sm:$0xff]
        %v260 = vld [vmem:[#allocation5 + $0x110] sm:$0xff]
        %v261 = vld [vmem:[#allocation5 + $0x118] sm:$0xff]
        %v262 = vld [vmem:[#allocation5 + $0x120] sm:$0xff]
        %v263 = vld [vmem:[#allocation5 + $0x128] sm:$0xff]
        %v264 = vld [vmem:[#allocation5 + $0x130] sm:$0xff]
        %v265 = vld [vmem:[#allocation5 + $0x138] sm:$0xff]
        %v266 = vld [vmem:[#allocation5 + $0x140] sm:$0xff]
        %v267 = vld [vmem:[#allocation5 + $0x148] sm:$0xff]
        %v268 = vld [vmem:[#allocation5 + $0x150] sm:$0xff]
        %v269 = vld [vmem:[#allocation5 + $0x158] sm:$0xff]
        %v270 = vld [vmem:[#allocation5 + $0x160] sm:$0xff]
        %v271 = vld [vmem:[#allocation5 + $0x168] sm:$0xff]
        %v272 = vld [vmem:[#allocation5 + $0x170] sm:$0xff]
        %v273 = vld [vmem:[#allocation5 + $0x178] sm:$0xff]
        %v274 = vld [vmem:[#allocation5 + $0x180] sm:$0xff]
        %v275 = vld [vmem:[#allocation5 + $0x188] sm:$0xff]
        %v276 = vld [vmem:[#allocation5 + $0x190] sm:$0xff]
        %v277 = vld [vmem:[#allocation5 + $0x198] sm:$0xff]
        %v278 = vld [vmem:[#allocation5 + $0x1a0] sm:$0xff]
        %v279 = vld [vmem:[#allocation5 + $0x1a8] sm:$0xff]
        %v280 = vld [vmem:[#allocation5 + $0x1b0] sm:$0xff]
        %v281 = vld [vmem:[#allocation5 + $0x1b8] sm:$0xff]
        %v282 = vld [vmem:[#allocation5 + $0x1c0] sm:$0xff]
        %v283 = vld [vmem:[#allocation5 + $0x1c8] sm:$0xff]
        %v284 = vld [vmem:[#allocation5 + $0x1d0] sm:$0xff]
        %v285 = vld [vmem:[#allocation5 + $0x1d8] sm:$0xff]
        %v286 = vld [vmem:[#allocation5 + $0x1e0] sm:$0xff]
        %v287 = vld [vmem:[#allocation5 + $0x1e8] sm:$0xff]
        %v288 = vld [vmem:[#allocation5 + $0x1f0] sm:$0xff]
        %v289 = vld [vmem:[#allocation5 + $0x1f8] sm:$0xff]
        %v290 = vld [vmem:[#allocation5 + $0x200] sm:$0xff]
        %v291 = vld [vmem:[#allocation5 + $0x208] sm:$0xff]
        %v292 = vld [vmem:[#allocation5 + $0x210] sm:$0xff]
        %v293 = vld [vmem:[#allocation5 + $0x218] sm:$0xff]
        %v294 = vld [vmem:[#allocation5 + $0x220] sm:$0xff]
        %v295 = vld [vmem:[#allocation5 + $0x228] sm:$0xff]
        %v296 = vld [vmem:[#allocation5 + $0x230] sm:$0xff]
        %v297 = vld [vmem:[#allocation5 + $0x238] sm:$0xff]
        %v298 = vld [vmem:[#allocation5 + $0x240] sm:$0xff]
        %v299 = vld [vmem:[#allocation5 + $0x248] sm:$0xff]
        %v300 = vld [vmem:[#allocation5 + $0x250] sm:$0xff]
        %v301 = vld [vmem:[#allocation5 + $0x258] sm:$0xff]
        %v302 = vld [vmem:[#allocation5 + $0x260] sm:$0xff]
        %v303 = vld [vmem:[#allocation5 + $0x268] sm:$0xff]
        %v304 = vld [vmem:[#allocation5 + $0x270] sm:$0xff]
        %v305 = vld [vmem:[#allocation5 + $0x278] sm:$0xff]
        %v306 = vld [vmem:[#allocation5 + $0x280] sm:$0xff]
        %v307 = vld [vmem:[#allocation5 + $0x288] sm:$0xff]
        %v308 = vld [vmem:[#allocation5 + $0x290] sm:$0xff]
        %v309 = vld [vmem:[#allocation5 + $0x298] sm:$0xff]
        %v310 = vld [vmem:[#allocation5 + $0x2a0] sm:$0xff]
        %v311 = vld [vmem:[#allocation5 + $0x2a8] sm:$0xff]
        %v312 = vld [vmem:[#allocation5 + $0x2b0] sm:$0xff]
        %v313 = vld [vmem:[#allocation5 + $0x2b8] sm:$0xff]
        %v314 = vld [vmem:[#allocation5 + $0x2c0] sm:$0xff]
        %v315 = vld [vmem:[#allocation5 + $0x2c8] sm:$0xff]
        %v316 = vld [vmem:[#allocation5 + $0x2d0] sm:$0xff]
        %v317 = vld [vmem:[#allocation5 + $0x2d8] sm:$0xff]
        %v318 = vld [vmem:[#allocation5 + $0x2e0] sm:$0xff]
        %v319 = vld [vmem:[#allocation5 + $0x2e8] sm:$0xff]
        %v320 = vld [vmem:[#allocation5 + $0x2f0] sm:$0xff]
        %v321 = vld [vmem:[#allocation5 + $0x2f8] sm:$0xff]
        %v322 = vld [vmem:[#allocation5 + $0x300] sm:$0xff]
        %v323 = vld [vmem:[#allocation5 + $0x308] sm:$0xff]
        %v324 = vld [vmem:[#allocation5 + $0x310] sm:$0xff]
        %v325 = vld [vmem:[#allocation5 + $0x318] sm:$0xff]
        %v326 = vld [vmem:[#allocation5 + $0x320] sm:$0xff]
        %v327 = vld [vmem:[#allocation5 + $0x328] sm:$0xff]
        %v328 = vld [vmem:[#allocation5 + $0x330] sm:$0xff]
        %v329 = vld [vmem:[#allocation5 + $0x338] sm:$0xff]
        %v330 = vld [vmem:[#allocation5 + $0x340] sm:$0xff]
        %v331 = vld [vmem:[#allocation5 + $0x348] sm:$0xff]
        %v332 = vld [vmem:[#allocation5 + $0x350] sm:$0xff]
        %v333 = vld [vmem:[#allocation5 + $0x358] sm:$0xff]
        %v334 = vld [vmem:[#allocation5 + $0x360] sm:$0xff]
        %v335 = vld [vmem:[#allocation5 + $0x368] sm:$0xff]
        %v336 = vld [vmem:[#allocation5 + $0x370] sm:$0xff]
        %v337 = vld [vmem:[#allocation5 + $0x378] sm:$0xff]
        %v338 = vld [vmem:[#allocation5 + $0x380] sm:$0xff]
        %v339 = vld [vmem:[#allocation5 + $0x388] sm:$0xff]
        %v340 = vld [vmem:[#allocation5 + $0x390] sm:$0xff]
        %v341 = vld [vmem:[#allocation5 + $0x398] sm:$0xff]
        %v342 = vld [vmem:[#allocation5 + $0x3a0] sm:$0xff]
        %v343 = vld [vmem:[#allocation5 + $0x3a8] sm:$0xff]
        %v344 = vld [vmem:[#allocation5 + $0x3b0] sm:$0xff]
        %v345 = vld [vmem:[#allocation5 + $0x3b8] sm:$0xff]
        %v346 = vld [vmem:[#allocation5 + $0x3c0] sm:$0xff]
        %v347 = vld [vmem:[#allocation5 + $0x3c8] sm:$0xff]
        %v348 = vld [vmem:[#allocation5 + $0x3d0] sm:$0xff]
        %v349 = vld [vmem:[#allocation5 + $0x3d8] sm:$0xff]
        %v350 = vld [vmem:[#allocation5 + $0x3e0] sm:$0xff]
        %v351 = vld [vmem:[#allocation5 + $0x3e8] sm:$0xff]
        %v352 = vld [vmem:[#allocation5 + $0x3f0] sm:$0xff]
        %v353 = vld [vmem:[#allocation5 + $0x3f8] sm:$0xff]
        %v354 = vld [vmem:[#allocation5 + $0x400] sm:$0xff]
        %v355 = vld [vmem:[#allocation5 + $0x408] sm:$0xff]
        %v356 = vld [vmem:[#allocation5 + $0x410] sm:$0xff]
        %v357 = vld [vmem:[#allocation5 + $0x418] sm:$0xff]
        %v358 = vld [vmem:[#allocation5 + $0x420] sm:$0xff]
        %v359 = vld [vmem:[#allocation5 + $0x428] sm:$0xff]
        %v360 = vld [vmem:[#allocation5 + $0x430] sm:$0xff]
        %v361 = vld [vmem:[#allocation5 + $0x438] sm:$0xff]
        %v362 = vld [vmem:[#allocation5 + $0x440] sm:$0xff]
        %v363 = vld [vmem:[#allocation5 + $0x448] sm:$0xff]
        %v364 = vld [vmem:[#allocation5 + $0x450] sm:$0xff]
        %v365 = vld [vmem:[#allocation5 + $0x458] sm:$0xff]
        %v366 = vld [vmem:[#allocation5 + $0x460] sm:$0xff]
        %v367 = vld [vmem:[#allocation5 + $0x468] sm:$0xff]
        %v368 = vld [vmem:[#allocation5 + $0x470] sm:$0xff]
        %v369 = vld [vmem:[#allocation5 + $0x478] sm:$0xff]
        %v370 = vld [vmem:[#allocation5 + $0x480] sm:$0xff]
        %v371 = vld [vmem:[#allocation5 + $0x488] sm:$0xff]
        %v372 = vld [vmem:[#allocation5 + $0x490] sm:$0xff]
        %v373 = vld [vmem:[#allocation5 + $0x498] sm:$0xff]
        %v374 = vld [vmem:[#allocation5 + $0x4a0] sm:$0xff]
        %v375 = vld [vmem:[#allocation5 + $0x4a8] sm:$0xff]
        %v376 = vld [vmem:[#allocation5 + $0x4b0] sm:$0xff]
        %v377 = vld [vmem:[#allocation5 + $0x4b8] sm:$0xff]
        %v378 = vld [vmem:[#allocation5 + $0x4c0] sm:$0xff]
        %v379 = vld [vmem:[#allocation5 + $0x4c8] sm:$0xff]
        %v380 = vld [vmem:[#allocation5 + $0x4d0] sm:$0xff]
        %v381 = vld [vmem:[#allocation5 + $0x4d8] sm:$0xff]
        %v382 = vld [vmem:[#allocation5 + $0x4e0] sm:$0xff]
        %v383 = vld [vmem:[#allocation5 + $0x4e8] sm:$0xff]
        %v384 = vld [vmem:[#allocation5 + $0x4f0] sm:$0xff]
        %v385 = vld [vmem:[#allocation5 + $0x4f8] sm:$0xff]
        %v386 = vld [vmem:[#allocation5 + $0x500] sm:$0xff]
        %v387 = vld [vmem:[#allocation5 + $0x508] sm:$0xff]
        %v388 = vld [vmem:[#allocation5 + $0x510] sm:$0xff]
        %v389 = vld [vmem:[#allocation5 + $0x518] sm:$0xff]
        %v390 = vld [vmem:[#allocation5 + $0x520] sm:$0xff]
        %v391 = vld [vmem:[#allocation5 + $0x528] sm:$0xff]
        %v392 = vld [vmem:[#allocation5 + $0x530] sm:$0xff]
        %v393 = vld [vmem:[#allocation5 + $0x538] sm:$0xff]
        %v394 = vld [vmem:[#allocation5 + $0x540] sm:$0xff]
        %v395 = vld [vmem:[#allocation5 + $0x548] sm:$0xff]
        %v396 = vld [vmem:[#allocation5 + $0x550] sm:$0xff]
        %v397 = vld [vmem:[#allocation5 + $0x558] sm:$0xff]
        %v398 = vld [vmem:[#allocation5 + $0x560] sm:$0xff]
        %v399 = vld [vmem:[#allocation5 + $0x568] sm:$0xff]
        %v400 = vld [vmem:[#allocation5 + $0x570] sm:$0xff]
        %v401 = vld [vmem:[#allocation5 + $0x578] sm:$0xff]
        %v402 = vld [vmem:[#allocation5 + $0x580] sm:$0xff]
        %v403 = vld [vmem:[#allocation5 + $0x588] sm:$0xff]
        %v404 = vld [vmem:[#allocation5 + $0x590] sm:$0xff]
        %v405 = vld [vmem:[#allocation5 + $0x598] sm:$0xff]
        %v406 = vld [vmem:[#allocation5 + $0x5a0] sm:$0xff]
        %v407 = vld [vmem:[#allocation5 + $0x5a8] sm:$0xff]
        %v408 = vld [vmem:[#allocation5 + $0x5b0] sm:$0xff]
        %v409 = vld [vmem:[#allocation5 + $0x5b8] sm:$0xff]
        %v410 = vld [vmem:[#allocation5 + $0x5c0] sm:$0xff]
        %v411 = vld [vmem:[#allocation5 + $0x5c8] sm:$0xff]
        %v412 = vld [vmem:[#allocation5 + $0x5d0] sm:$0xff]
        %v413 = vld [vmem:[#allocation5 + $0x5d8] sm:$0xff]
        %v414 = vld [vmem:[#allocation5 + $0x5e0] sm:$0xff]
        %v415 = vld [vmem:[#allocation5 + $0x5e8] sm:$0xff]
        %v416 = vld [vmem:[#allocation5 + $0x5f0] sm:$0xff]
        %v417 = vld [vmem:[#allocation5 + $0x5f8] sm:$0xff]
        %v418 = vld [vmem:[#allocation5 + $0x600] sm:$0xff]
        %v419 = vld [vmem:[#allocation5 + $0x608] sm:$0xff]
        %v420 = vld [vmem:[#allocation5 + $0x610] sm:$0xff]
        %v421 = vld [vmem:[#allocation5 + $0x618] sm:$0xff]
        %v422 = vld [vmem:[#allocation5 + $0x620] sm:$0xff]
        %v423 = vld [vmem:[#allocation5 + $0x628] sm:$0xff]
        %v424 = vld [vmem:[#allocation5 + $0x630] sm:$0xff]
        %v425 = vld [vmem:[#allocation5 + $0x638] sm:$0xff]
        %v426 = vld [vmem:[#allocation5 + $0x640] sm:$0xff]
        %v427 = vld [vmem:[#allocation5 + $0x648] sm:$0xff]
        %v428 = vld [vmem:[#allocation5 + $0x650] sm:$0xff]
        %v429 = vld [vmem:[#allocation5 + $0x658] sm:$0xff]
        %v430 = vld [vmem:[#allocation5 + $0x660] sm:$0xff]
        %v431 = vld [vmem:[#allocation5 + $0x668] sm:$0xff]
        %v432 = vld [vmem:[#allocation5 + $0x670] sm:$0xff]
        %v433 = vld [vmem:[#allocation5 + $0x678] sm:$0xff]
        %v434 = vld [vmem:[#allocation5 + $0x680] sm:$0xff]
        %v435 = vld [vmem:[#allocation5 + $0x688] sm:$0xff]
        %v436 = vld [vmem:[#allocation5 + $0x690] sm:$0xff]
        %v437 = vld [vmem:[#allocation5 + $0x698] sm:$0xff]
        %v438 = vld [vmem:[#allocation5 + $0x6a0] sm:$0xff]
        %v439 = vld [vmem:[#allocation5 + $0x6a8] sm:$0xff]
        %v440 = vld [vmem:[#allocation5 + $0x6b0] sm:$0xff]
        %v441 = vld [vmem:[#allocation5 + $0x6b8] sm:$0xff]
        %v442 = vld [vmem:[#allocation5 + $0x6c0] sm:$0xff]
        %v443 = vld [vmem:[#allocation5 + $0x6c8] sm:$0xff]
        %v444 = vld [vmem:[#allocation5 + $0x6d0] sm:$0xff]
        %v445 = vld [vmem:[#allocation5 + $0x6d8] sm:$0xff]
        %v446 = vld [vmem:[#allocation5 + $0x6e0] sm:$0xff]
        %v447 = vld [vmem:[#allocation5 + $0x6e8] sm:$0xff]
        %v448 = vld [vmem:[#allocation5 + $0x6f0] sm:$0xff]
        %v449 = vld [vmem:[#allocation5 + $0x6f8] sm:$0xff]
        %v450 = vld [vmem:[#allocation5 + $0x700] sm:$0xff]
        %v451 = vld [vmem:[#allocation5 + $0x708] sm:$0xff]
        %v452 = vld [vmem:[#allocation5 + $0x710] sm:$0xff]
        %v453 = vld [vmem:[#allocation5 + $0x718] sm:$0xff]
        %v454 = vld [vmem:[#allocation5 + $0x720] sm:$0xff]
        %v455 = vld [vmem:[#allocation5 + $0x728] sm:$0xff]
        %v456 = vld [vmem:[#allocation5 + $0x730] sm:$0xff]
        %v457 = vld [vmem:[#allocation5 + $0x738] sm:$0xff]
        %v458 = vld [vmem:[#allocation5 + $0x740] sm:$0xff]
        %v459 = vld [vmem:[#allocation5 + $0x748] sm:$0xff]
        %v460 = vld [vmem:[#allocation5 + $0x750] sm:$0xff]
        %v461 = vld [vmem:[#allocation5 + $0x758] sm:$0xff]
        %v462 = vld [vmem:[#allocation5 + $0x760] sm:$0xff]
        %v463 = vld [vmem:[#allocation5 + $0x768] sm:$0xff]
        %v464 = vld [vmem:[#allocation5 + $0x770] sm:$0xff]
        %v465 = vld [vmem:[#allocation5 + $0x778] sm:$0xff]
        %v466 = vld [vmem:[#allocation5 + $0x780] sm:$0xff]
        %v467 = vld [vmem:[#allocation5 + $0x788] sm:$0xff]
        %v468 = vld [vmem:[#allocation5 + $0x790] sm:$0xff]
        %v469 = vld [vmem:[#allocation5 + $0x798] sm:$0xff]
        %v470 = vld [vmem:[#allocation5 + $0x7a0] sm:$0xff]
        %v471 = vld [vmem:[#allocation5 + $0x7a8] sm:$0xff]
        %v472 = vld [vmem:[#allocation5 + $0x7b0] sm:$0xff]
        %v473 = vld [vmem:[#allocation5 + $0x7b8] sm:$0xff]
        %v474 = vld [vmem:[#allocation5 + $0x7c0] sm:$0xff]
        %v475 = vld [vmem:[#allocation5 + $0x7c8] sm:$0xff]
        %v476 = vld [vmem:[#allocation5 + $0x7d0] sm:$0xff]
        %v477 = vld [vmem:[#allocation5 + $0x7d8] sm:$0xff]
        %v478 = vld [vmem:[#allocation5 + $0x7e0] sm:$0xff]
        %v479 = vld [vmem:[#allocation5 + $0x7e8] sm:$0xff]
        %v480 = vld [vmem:[#allocation5 + $0x7f0] sm:$0xff]
        %v481 = vld [vmem:[#allocation5 + $0x7f8] sm:$0xff]
        %v482 = vld [vmem:[#allocation5 + $0x800] sm:$0xff]
        %v483 = vld [vmem:[#allocation5 + $0x808] sm:$0xff]
        %v484 = vld [vmem:[#allocation5 + $0x810] sm:$0xff]
        %v485 = vld [vmem:[#allocation5 + $0x818] sm:$0xff]
        %v486 = vld [vmem:[#allocation5 + $0x820] sm:$0xff]
        %v487 = vld [vmem:[#allocation5 + $0x828] sm:$0xff]
        %v488 = vld [vmem:[#allocation5 + $0x830] sm:$0xff]
        %v489 = vld [vmem:[#allocation5 + $0x838] sm:$0xff]
        %v490 = vld [vmem:[#allocation5 + $0x840] sm:$0xff]
        %v491 = vld [vmem:[#allocation5 + $0x848] sm:$0xff]
        %v492 = vld [vmem:[#allocation5 + $0x850] sm:$0xff]
        %v493 = vld [vmem:[#allocation5 + $0x858] sm:$0xff]
        %v494 = vld [vmem:[#allocation5 + $0x860] sm:$0xff]
        %v495 = vld [vmem:[#allocation5 + $0x868] sm:$0xff]
        %v496 = vld [vmem:[#allocation5 + $0x870] sm:$0xff]
        %v497 = vld [vmem:[#allocation5 + $0x878] sm:$0xff]
        %v498 = vld [vmem:[#allocation5 + $0x880] sm:$0xff]
        %v499 = vld [vmem:[#allocation5 + $0x888] sm:$0xff]
        %v500 = vld [vmem:[#allocation5 + $0x890] sm:$0xff]
        %v501 = vld [vmem:[#allocation5 + $0x898] sm:$0xff]
        %v502 = vld [vmem:[#allocation5 + $0x8a0] sm:$0xff]
        %v503 = vld [vmem:[#allocation5 + $0x8a8] sm:$0xff]
        %v504 = vld [vmem:[#allocation5 + $0x8b0] sm:$0xff]
        %v505 = vld [vmem:[#allocation5 + $0x8b8] sm:$0xff]
        %v506 = vld [vmem:[#allocation5 + $0x8c0] sm:$0xff]
        %v507 = vld [vmem:[#allocation5 + $0x8c8] sm:$0xff]
        %v508 = vld [vmem:[#allocation5 + $0x8d0] sm:$0xff]
        %v509 = vld [vmem:[#allocation5 + $0x8d8] sm:$0xff]
        %v510 = vld [vmem:[#allocation5 + $0x8e0] sm:$0xff]
        %v511 = vld [vmem:[#allocation5 + $0x8e8] sm:$0xff]
        %v512 = vld [vmem:[#allocation5 + $0x8f0] sm:$0xff]
        %v513 = vld [vmem:[#allocation5 + $0x8f8] sm:$0xff]
        %v514 = vld [vmem:[#allocation5 + $0x900] sm:$0xff]
        %v515 = vld [vmem:[#allocation5 + $0x908] sm:$0xff]
        %v516 = vld [vmem:[#allocation5 + $0x910] sm:$0xff]
        %v517 = vld [vmem:[#allocation5 + $0x918] sm:$0xff]
        %v518 = vld [vmem:[#allocation5 + $0x920] sm:$0xff]
        %v519 = vld [vmem:[#allocation5 + $0x928] sm:$0xff]
        %v520 = vld [vmem:[#allocation5 + $0x930] sm:$0xff]
        %v521 = vld [vmem:[#allocation5 + $0x938] sm:$0xff]
        %v522 = vld [vmem:[#allocation5 + $0x940] sm:$0xff]
        %v523 = vld [vmem:[#allocation5 + $0x948] sm:$0xff]
        %v524 = vld [vmem:[#allocation5 + $0x950] sm:$0xff]
        %v525 = vld [vmem:[#allocation5 + $0x958] sm:$0xff]
        %v526 = vld [vmem:[#allocation5 + $0x960] sm:$0xff]
        %v527 = vld [vmem:[#allocation5 + $0x968] sm:$0xff]
        %v528 = vld [vmem:[#allocation5 + $0x970] sm:$0xff]
        %v529 = vld [vmem:[#allocation5 + $0x978] sm:$0xff]
        %v530 = vld [vmem:[#allocation5 + $0x980] sm:$0xff]
        %v531 = vld [vmem:[#allocation5 + $0x988] sm:$0xff]
        %v532 = vld [vmem:[#allocation5 + $0x990] sm:$0xff]
        %v533 = vld [vmem:[#allocation5 + $0x998] sm:$0xff]
        %v534 = vld [vmem:[#allocation5 + $0x9a0] sm:$0xff]
        %v535 = vld [vmem:[#allocation5 + $0x9a8] sm:$0xff]
        %v536 = vld [vmem:[#allocation5 + $0x9b0] sm:$0xff]
        %v537 = vld [vmem:[#allocation5 + $0x9b8] sm:$0xff]
        %v538 = vld [vmem:[#allocation5 + $0x9c0] sm:$0xff]
        %v539 = vld [vmem:[#allocation5 + $0x9c8] sm:$0xff]
        %v540 = vld [vmem:[#allocation5 + $0x9d0] sm:$0xff]
        %v541 = vld [vmem:[#allocation5 + $0x9d8] sm:$0xff]
        %v542 = vld [vmem:[#allocation5 + $0x9e0] sm:$0xff]
        %v543 = vld [vmem:[#allocation5 + $0x9e8] sm:$0xff]
        %v544 = vld [vmem:[#allocation5 + $0x9f0] sm:$0xff]
        %v545 = vld [vmem:[#allocation5 + $0x9f8] sm:$0xff]
        %v546 = vld [vmem:[#allocation5 + $0xa00] sm:$0xff]
        %v547 = vld [vmem:[#allocation5 + $0xa08] sm:$0xff]
        %v548 = vld [vmem:[#allocation5 + $0xa10] sm:$0xff]
        %v549 = vld [vmem:[#allocation5 + $0xa18] sm:$0xff]
        %v550 = vld [vmem:[#allocation5 + $0xa20] sm:$0xff]
        %v551 = vld [vmem:[#allocation5 + $0xa28] sm:$0xff]
        %v552 = vld [vmem:[#allocation5 + $0xa30] sm:$0xff]
        %v553 = vld [vmem:[#allocation5 + $0xa38] sm:$0xff]
        %v554 = vld [vmem:[#allocation5 + $0xa40] sm:$0xff]
        %v555 = vld [vmem:[#allocation5 + $0xa48] sm:$0xff]
        %v556 = vld [vmem:[#allocation5 + $0xa50] sm:$0xff]
        %v557 = vld [vmem:[#allocation5 + $0xa58] sm:$0xff]
        %v558 = vld [vmem:[#allocation5 + $0xa60] sm:$0xff]
        %v559 = vld [vmem:[#allocation5 + $0xa68] sm:$0xff]
        %v560 = vld [vmem:[#allocation5 + $0xa70] sm:$0xff]
        %v561 = vld [vmem:[#allocation5 + $0xa78] sm:$0xff]
        %v562 = vld [vmem:[#allocation5 + $0xa80] sm:$0xff]
        %v563 = vld [vmem:[#allocation5 + $0xa88] sm:$0xff]
        %v564 = vld [vmem:[#allocation5 + $0xa90] sm:$0xff]
        %v565 = vld [vmem:[#allocation5 + $0xa98] sm:$0xff]
        %v566 = vld [vmem:[#allocation5 + $0xaa0] sm:$0xff]
        %v567 = vld [vmem:[#allocation5 + $0xaa8] sm:$0xff]
        %v568 = vld [vmem:[#allocation5 + $0xab0] sm:$0xff]
        %v569 = vld [vmem:[#allocation5 + $0xab8] sm:$0xff]
        %v570 = vld [vmem:[#allocation5 + $0xac0] sm:$0xff]
        %v571 = vld [vmem:[#allocation5 + $0xac8] sm:$0xff]
        %v572 = vld [vmem:[#allocation5 + $0xad0] sm:$0xff]
        %v573 = vld [vmem:[#allocation5 + $0xad8] sm:$0xff]
        %v574 = vld [vmem:[#allocation5 + $0xae0] sm:$0xff]
        %v575 = vld [vmem:[#allocation5 + $0xae8] sm:$0xff]
        %v576 = vld [vmem:[#allocation5 + $0xaf0] sm:$0xff]
        %v577 = vld [vmem:[#allocation5 + $0xaf8] sm:$0xff]
        %v578 = vld [vmem:[#allocation5 + $0xb00] sm:$0xff]
        %v579 = vld [vmem:[#allocation5 + $0xb08] sm:$0xff]
        %v580 = vld [vmem:[#allocation5 + $0xb10] sm:$0xff]
        %v581 = vld [vmem:[#allocation5 + $0xb18] sm:$0xff]
        %v582 = vld [vmem:[#allocation5 + $0xb20] sm:$0xff]
        %v583 = vld [vmem:[#allocation5 + $0xb28] sm:$0xff]
        %v584 = vld [vmem:[#allocation5 + $0xb30] sm:$0xff]
        %v585 = vld [vmem:[#allocation5 + $0xb38] sm:$0xff]
        %v586 = vld [vmem:[#allocation5 + $0xb40] sm:$0xff]
        %v587 = vld [vmem:[#allocation5 + $0xb48] sm:$0xff]
        %v588 = vld [vmem:[#allocation5 + $0xb50] sm:$0xff]
        %v589 = vld [vmem:[#allocation5 + $0xb58] sm:$0xff]
        %v590 = vld [vmem:[#allocation5 + $0xb60] sm:$0xff]
        %v591 = vld [vmem:[#allocation5 + $0xb68] sm:$0xff]
        %v592 = vld [vmem:[#allocation5 + $0xb70] sm:$0xff]
        %v593 = vld [vmem:[#allocation5 + $0xb78] sm:$0xff]
        %v594 = vld [vmem:[#allocation5 + $0xb80] sm:$0xff]
        %v595 = vld [vmem:[#allocation5 + $0xb88] sm:$0xff]
        %v596 = vld [vmem:[#allocation5 + $0xb90] sm:$0xff]
        %v597 = vld [vmem:[#allocation5 + $0xb98] sm:$0xff]
        %v598 = vld [vmem:[#allocation5 + $0xba0] sm:$0xff]
        %v599 = vld [vmem:[#allocation5 + $0xba8] sm:$0xff]
        %v600 = vld [vmem:[#allocation5 + $0xbb0] sm:$0xff]
        %v601 = vld [vmem:[#allocation5 + $0xbb8] sm:$0xff]
        %v602 = vld [vmem:[#allocation5 + $0xbc0] sm:$0xff]
        %v603 = vld [vmem:[#allocation5 + $0xbc8] sm:$0xff]
        %v604 = vld [vmem:[#allocation5 + $0xbd0] sm:$0xff]
        %v605 = vld [vmem:[#allocation5 + $0xbd8] sm:$0xff]
        %v606 = vld [vmem:[#allocation5 + $0xbe0] sm:$0xff]
        %v607 = vld [vmem:[#allocation5 + $0xbe8] sm:$0xff]
        %v608 = vld [vmem:[#allocation5 + $0xbf0] sm:$0xff]
        %v609 = vld [vmem:[#allocation5 + $0xbf8] sm:$0xff]
        %v610 = vld [vmem:[#allocation7] sm:$0x3]
        %v612 = vlaneseq
        %v613 = vshrl.u32 %v612, 7
        %v614 = vsub.s32 0, %v613
        %v615 = vrot.slane %v610, %v614
        %v616 = vlaneseq
        %v617 = vshrl.u32 %v616, 7
        %v618 = vsub.s32 1, %v617
        %v619 = vrot.slane %v610, %v618
        %622 = vmatprep.subr.mxu0 %v227
        %623 = vmatpush1.msra.mxu0 %v226
        %624 = vmatprep.subr.mxu0 %v229
        %625 = vmatpush1.msra.mxu0 %v228
        %626 = vmatprep.subr.mxu0 %v231
        %627 = vmatpush1.msra.mxu0 %v230
        %628 = vmatprep.subr.mxu0 %v233
        %629 = vmatpush1.msra.mxu0 %v232
        %630 = vmatprep.subr.mxu0 %v235
        %631 = vmatpush1.msra.mxu0 %v234
        %632 = vmatprep.subr.mxu0 %v237
        %633 = vmatpush1.msra.mxu0 %v236
        %634 = vmatprep.subr.mxu0 %v239
        %635 = vmatpush1.msra.mxu0 %v238
        %636 = vmatprep.subr.mxu0 %v241
        %637 = vmatpush1.msra.mxu0 %v240
        %638 = vmatprep.subr.mxu0 %v243
        %639 = vmatpush1.msra.mxu0 %v242
        %640 = vmatprep.subr.mxu0 %v245
        %641 = vmatpush1.msra.mxu0 %v244
        %642 = vmatprep.subr.mxu0 %v247
        %643 = vmatpush1.msra.mxu0 %v246
        %644 = vmatprep.subr.mxu0 %v249
        %645 = vmatpush1.msra.mxu0 %v248
        %646 = vmatprep.subr.mxu0 %v251
        %647 = vmatpush1.msra.mxu0 %v250
        %648 = vmatprep.subr.mxu0 %v253
        %649 = vmatpush1.msra.mxu0 %v252
        %650 = vmatprep.subr.mxu0 %v255
        %651 = vmatpush1.msra.mxu0 %v254
        %652 = vmatprep.subr.mxu0 %v257
        %653 = vmatpush1.msra.mxu0 %v256
        %654 = vmatprep.subr.mxu0 %v259
        %655 = vmatpush1.msra.mxu0 %v258
        %656 = vmatprep.subr.mxu0 %v261
        %657 = vmatpush1.msra.mxu0 %v260
        %658 = vmatprep.subr.mxu0 %v263
        %659 = vmatpush1.msra.mxu0 %v262
        %660 = vmatprep.subr.mxu0 %v265
        %661 = vmatpush1.msra.mxu0 %v264
        %662 = vmatprep.subr.mxu0 %v267
        %663 = vmatpush1.msra.mxu0 %v266
        %664 = vmatprep.subr.mxu0 %v269
        %665 = vmatpush1.msra.mxu0 %v268
        %666 = vmatprep.subr.mxu0 %v271
        %667 = vmatpush1.msra.mxu0 %v270
        %668 = vmatprep.subr.mxu0 %v273
        %669 = vmatpush1.msra.mxu0 %v272
        %670 = vmatprep.subr.mxu0 %v275
        %671 = vmatpush1.msra.mxu0 %v274
        %672 = vmatprep.subr.mxu0 %v277
        %673 = vmatpush1.msra.mxu0 %v276
        %674 = vmatprep.subr.mxu0 %v279
        %675 = vmatpush1.msra.mxu0 %v278
        %676 = vmatprep.subr.mxu0 %v281
        %677 = vmatpush1.msra.mxu0 %v280
        %678 = vmatprep.subr.mxu0 %v283
        %679 = vmatpush1.msra.mxu0 %v282
        %680 = vmatprep.subr.mxu0 %v285
        %681 = vmatpush1.msra.mxu0 %v284
        %682 = vmatprep.subr.mxu0 %v287
        %683 = vmatpush1.msra.mxu0 %v286
        %684 = vmatprep.subr.mxu0 %v289
        %685 = vmatpush1.msra.mxu0 %v288
        %686 = vmatprep.mubr.f32.mxu0 %v215
        %687 = vmatmul.mubr.f32.gmra.mrb[0].mxu0 %v214
        %v688 = vpop.f32.mrb[0].mxu0
        %v689 = vadd.f32 %v615, %v688
        %v690 = vpop.f32.mrb[0].mxu0
        %v691 = vadd.f32 %v619, %v690
        %692 = vdwg.mxu0
        %693 = vmatprep.subr.mxu0 %v291
        %694 = vmatpush1.msra.mxu0 %v290
        %695 = vmatprep.subr.mxu0 %v293
        %696 = vmatpush1.msra.mxu0 %v292
        %697 = vmatprep.subr.mxu0 %v295
        %698 = vmatpush1.msra.mxu0 %v294
        %699 = vmatprep.subr.mxu0 %v297
        %700 = vmatpush1.msra.mxu0 %v296
        %701 = vmatprep.subr.mxu0 %v299
        %702 = vmatpush1.msra.mxu0 %v298
        %703 = vmatprep.subr.mxu0 %v301
        %704 = vmatpush1.msra.mxu0 %v300
        %705 = vmatprep.subr.mxu0 %v303
        %706 = vmatpush1.msra.mxu0 %v302
        %707 = vmatprep.subr.mxu0 %v305
        %708 = vmatpush1.msra.mxu0 %v304
        %709 = vmatprep.subr.mxu0 %v307
        %710 = vmatpush1.msra.mxu0 %v306
        %711 = vmatprep.subr.mxu0 %v309
        %712 = vmatpush1.msra.mxu0 %v308
        %713 = vmatprep.subr.mxu0 %v311
        %714 = vmatpush1.msra.mxu0 %v310
        %715 = vmatprep.subr.mxu0 %v313
        %716 = vmatpush1.msra.mxu0 %v312
        %717 = vmatprep.subr.mxu0 %v315
        %718 = vmatpush1.msra.mxu0 %v314
        %719 = vmatprep.subr.mxu0 %v317
        %720 = vmatpush1.msra.mxu0 %v316
        %721 = vmatprep.subr.mxu0 %v319
        %722 = vmatpush1.msra.mxu0 %v318
        %723 = vmatprep.subr.mxu0 %v321
        %724 = vmatpush1.msra.mxu0 %v320
        %725 = vmatprep.subr.mxu0 %v323
        %726 = vmatpush1.msra.mxu0 %v322
        %727 = vmatprep.subr.mxu0 %v325
        %728 = vmatpush1.msra.mxu0 %v324
        %729 = vmatprep.subr.mxu0 %v327
        %730 = vmatpush1.msra.mxu0 %v326
        %731 = vmatprep.subr.mxu0 %v329
        %732 = vmatpush1.msra.mxu0 %v328
        %733 = vmatprep.subr.mxu0 %v331
        %734 = vmatpush1.msra.mxu0 %v330
        %735 = vmatprep.subr.mxu0 %v333
        %736 = vmatpush1.msra.mxu0 %v332
        %737 = vmatprep.subr.mxu0 %v335
        %738 = vmatpush1.msra.mxu0 %v334
        %739 = vmatprep.subr.mxu0 %v337
        %740 = vmatpush1.msra.mxu0 %v336
        %741 = vmatprep.subr.mxu0 %v339
        %742 = vmatpush1.msra.mxu0 %v338
        %743 = vmatprep.subr.mxu0 %v341
        %744 = vmatpush1.msra.mxu0 %v340
        %745 = vmatprep.subr.mxu0 %v343
        %746 = vmatpush1.msra.mxu0 %v342
        %747 = vmatprep.subr.mxu0 %v345
        %748 = vmatpush1.msra.mxu0 %v344
        %749 = vmatprep.subr.mxu0 %v347
        %750 = vmatpush1.msra.mxu0 %v346
        %751 = vmatprep.subr.mxu0 %v349
        %752 = vmatpush1.msra.mxu0 %v348
        %753 = vmatprep.subr.mxu0 %v351
        %754 = vmatpush1.msra.mxu0 %v350
        %755 = vmatprep.subr.mxu0 %v353
        %756 = vmatpush1.msra.mxu0 %v352
        %757 = vmatprep.mubr.f32.mxu0 %v217
        %758 = vmatmul.mubr.f32.gmra.mrb[0].mxu0 %v216
        %v759 = vpop.f32.mrb[0].mxu0
        %v760 = vadd.f32 %v689, %v759
        %v761 = vpop.f32.mrb[0].mxu0
        %v762 = vadd.f32 %v691, %v761
        %763 = vdwg.mxu0
        %764 = vmatprep.subr.mxu0 %v355
        %765 = vmatpush1.msra.mxu0 %v354
        %766 = vmatprep.subr.mxu0 %v357
        %767 = vmatpush1.msra.mxu0 %v356
        %768 = vmatprep.subr.mxu0 %v359
        %769 = vmatpush1.msra.mxu0 %v358
        %770 = vmatprep.subr.mxu0 %v361
        %771 = vmatpush1.msra.mxu0 %v360
        %772 = vmatprep.subr.mxu0 %v363
        %773 = vmatpush1.msra.mxu0 %v362
        %774 = vmatprep.subr.mxu0 %v365
        %775 = vmatpush1.msra.mxu0 %v364
        %776 = vmatprep.subr.mxu0 %v367
        %777 = vmatpush1.msra.mxu0 %v366
        %778 = vmatprep.subr.mxu0 %v369
        %779 = vmatpush1.msra.mxu0 %v368
        %780 = vmatprep.subr.mxu0 %v371
        %781 = vmatpush1.msra.mxu0 %v370
        %782 = vmatprep.subr.mxu0 %v373
        %783 = vmatpush1.msra.mxu0 %v372
        %784 = vmatprep.subr.mxu0 %v375
        %785 = vmatpush1.msra.mxu0 %v374
        %786 = vmatprep.subr.mxu0 %v377
        %787 = vmatpush1.msra.mxu0 %v376
        %788 = vmatprep.subr.mxu0 %v379
        %789 = vmatpush1.msra.mxu0 %v378
        %790 = vmatprep.subr.mxu0 %v381
        %791 = vmatpush1.msra.mxu0 %v380
        %792 = vmatprep.subr.mxu0 %v383
        %793 = vmatpush1.msra.mxu0 %v382
        %794 = vmatprep.subr.mxu0 %v385
        %795 = vmatpush1.msra.mxu0 %v384
        %796 = vmatprep.subr.mxu0 %v387
        %797 = vmatpush1.msra.mxu0 %v386
        %798 = vmatprep.subr.mxu0 %v389
        %799 = vmatpush1.msra.mxu0 %v388
        %800 = vmatprep.subr.mxu0 %v391
        %801 = vmatpush1.msra.mxu0 %v390
        %802 = vmatprep.subr.mxu0 %v393
        %803 = vmatpush1.msra.mxu0 %v392
        %804 = vmatprep.subr.mxu0 %v395
        %805 = vmatpush1.msra.mxu0 %v394
        %806 = vmatprep.subr.mxu0 %v397
        %807 = vmatpush1.msra.mxu0 %v396
        %808 = vmatprep.subr.mxu0 %v399
        %809 = vmatpush1.msra.mxu0 %v398
        %810 = vmatprep.subr.mxu0 %v401
        %811 = vmatpush1.msra.mxu0 %v400
        %812 = vmatprep.subr.mxu0 %v403
        %813 = vmatpush1.msra.mxu0 %v402
        %814 = vmatprep.subr.mxu0 %v405
        %815 = vmatpush1.msra.mxu0 %v404
        %816 = vmatprep.subr.mxu0 %v407
        %817 = vmatpush1.msra.mxu0 %v406
        %818 = vmatprep.subr.mxu0 %v409
        %819 = vmatpush1.msra.mxu0 %v408
        %820 = vmatprep.subr.mxu0 %v411
        %821 = vmatpush1.msra.mxu0 %v410
        %822 = vmatprep.subr.mxu0 %v413
        %823 = vmatpush1.msra.mxu0 %v412
        %824 = vmatprep.subr.mxu0 %v415
        %825 = vmatpush1.msra.mxu0 %v414
        %826 = vmatprep.subr.mxu0 %v417
        %827 = vmatpush1.msra.mxu0 %v416
        %828 = vmatprep.mubr.f32.mxu0 %v219
        %829 = vmatmul.mubr.f32.gmra.mrb[0].mxu0 %v218
        %v830 = vpop.f32.mrb[0].mxu0
        %v831 = vadd.f32 %v760, %v830
        %v832 = vpop.f32.mrb[0].mxu0
        %v833 = vadd.f32 %v762, %v832
        %834 = vdwg.mxu0
        %835 = vmatprep.subr.mxu0 %v419
        %836 = vmatpush1.msra.mxu0 %v418
        %837 = vmatprep.subr.mxu0 %v421
        %838 = vmatpush1.msra.mxu0 %v420
        %839 = vmatprep.subr.mxu0 %v423
        %840 = vmatpush1.msra.mxu0 %v422
        %841 = vmatprep.subr.mxu0 %v425
        %842 = vmatpush1.msra.mxu0 %v424
        %843 = vmatprep.subr.mxu0 %v427
        %844 = vmatpush1.msra.mxu0 %v426
        %845 = vmatprep.subr.mxu0 %v429
        %846 = vmatpush1.msra.mxu0 %v428
        %847 = vmatprep.subr.mxu0 %v431
        %848 = vmatpush1.msra.mxu0 %v430
        %849 = vmatprep.subr.mxu0 %v433
        %850 = vmatpush1.msra.mxu0 %v432
        %851 = vmatprep.subr.mxu0 %v435
        %852 = vmatpush1.msra.mxu0 %v434
        %853 = vmatprep.subr.mxu0 %v437
        %854 = vmatpush1.msra.mxu0 %v436
        %855 = vmatprep.subr.mxu0 %v439
        %856 = vmatpush1.msra.mxu0 %v438
        %857 = vmatprep.subr.mxu0 %v441
        %858 = vmatpush1.msra.mxu0 %v440
        %859 = vmatprep.subr.mxu0 %v443
        %860 = vmatpush1.msra.mxu0 %v442
        %861 = vmatprep.subr.mxu0 %v445
        %862 = vmatpush1.msra.mxu0 %v444
        %863 = vmatprep.subr.mxu0 %v447
        %864 = vmatpush1.msra.mxu0 %v446
        %865 = vmatprep.subr.mxu0 %v449
        %866 = vmatpush1.msra.mxu0 %v448
        %867 = vmatprep.subr.mxu0 %v451
        %868 = vmatpush1.msra.mxu0 %v450
        %869 = vmatprep.subr.mxu0 %v453
        %870 = vmatpush1.msra.mxu0 %v452
        %871 = vmatprep.subr.mxu0 %v455
        %872 = vmatpush1.msra.mxu0 %v454
        %873 = vmatprep.subr.mxu0 %v457
        %874 = vmatpush1.msra.mxu0 %v456
        %875 = vmatprep.subr.mxu0 %v459
        %876 = vmatpush1.msra.mxu0 %v458
        %877 = vmatprep.subr.mxu0 %v461
        %878 = vmatpush1.msra.mxu0 %v460
        %879 = vmatprep.subr.mxu0 %v463
        %880 = vmatpush1.msra.mxu0 %v462
        %881 = vmatprep.subr.mxu0 %v465
        %882 = vmatpush1.msra.mxu0 %v464
        %883 = vmatprep.subr.mxu0 %v467
        %884 = vmatpush1.msra.mxu0 %v466
        %885 = vmatprep.subr.mxu0 %v469
        %886 = vmatpush1.msra.mxu0 %v468
        %887 = vmatprep.subr.mxu0 %v471
        %888 = vmatpush1.msra.mxu0 %v470
        %889 = vmatprep.subr.mxu0 %v473
        %890 = vmatpush1.msra.mxu0 %v472
        %891 = vmatprep.subr.mxu0 %v475
        %892 = vmatpush1.msra.mxu0 %v474
        %893 = vmatprep.subr.mxu0 %v477
        %894 = vmatpush1.msra.mxu0 %v476
        %895 = vmatprep.subr.mxu0 %v479
        %896 = vmatpush1.msra.mxu0 %v478
        %897 = vmatprep.subr.mxu0 %v481
        %898 = vmatpush1.msra.mxu0 %v480
        %899 = vmatprep.mubr.f32.mxu0 %v221
        %900 = vmatmul.mubr.f32.gmra.mrb[0].mxu0 %v220
        %v901 = vpop.f32.mrb[0].mxu0
        %v902 = vadd.f32 %v831, %v901
        %v903 = vpop.f32.mrb[0].mxu0
        %v904 = vadd.f32 %v833, %v903
        %905 = vdwg.mxu0
        %906 = vmatprep.subr.mxu0 %v483
        %907 = vmatpush1.msra.mxu0 %v482
        %908 = vmatprep.subr.mxu0 %v485
        %909 = vmatpush1.msra.mxu0 %v484
        %910 = vmatprep.subr.mxu0 %v487
        %911 = vmatpush1.msra.mxu0 %v486
        %912 = vmatprep.subr.mxu0 %v489
        %913 = vmatpush1.msra.mxu0 %v488
        %914 = vmatprep.subr.mxu0 %v491
        %915 = vmatpush1.msra.mxu0 %v490
        %916 = vmatprep.subr.mxu0 %v493
        %917 = vmatpush1.msra.mxu0 %v492
        %918 = vmatprep.subr.mxu0 %v495
        %919 = vmatpush1.msra.mxu0 %v494
        %920 = vmatprep.subr.mxu0 %v497
        %921 = vmatpush1.msra.mxu0 %v496
        %922 = vmatprep.subr.mxu0 %v499
        %923 = vmatpush1.msra.mxu0 %v498
        %924 = vmatprep.subr.mxu0 %v501
        %925 = vmatpush1.msra.mxu0 %v500
        %926 = vmatprep.subr.mxu0 %v503
        %927 = vmatpush1.msra.mxu0 %v502
        %928 = vmatprep.subr.mxu0 %v505
        %929 = vmatpush1.msra.mxu0 %v504
        %930 = vmatprep.subr.mxu0 %v507
        %931 = vmatpush1.msra.mxu0 %v506
        %932 = vmatprep.subr.mxu0 %v509
        %933 = vmatpush1.msra.mxu0 %v508
        %934 = vmatprep.subr.mxu0 %v511
        %935 = vmatpush1.msra.mxu0 %v510
        %936 = vmatprep.subr.mxu0 %v513
        %937 = vmatpush1.msra.mxu0 %v512
        %938 = vmatprep.subr.mxu0 %v515
        %939 = vmatpush1.msra.mxu0 %v514
        %940 = vmatprep.subr.mxu0 %v517
        %941 = vmatpush1.msra.mxu0 %v516
        %942 = vmatprep.subr.mxu0 %v519
        %943 = vmatpush1.msra.mxu0 %v518
        %944 = vmatprep.subr.mxu0 %v521
        %945 = vmatpush1.msra.mxu0 %v520
        %946 = vmatprep.subr.mxu0 %v523
        %947 = vmatpush1.msra.mxu0 %v522
        %948 = vmatprep.subr.mxu0 %v525
        %949 = vmatpush1.msra.mxu0 %v524
        %950 = vmatprep.subr.mxu0 %v527
        %951 = vmatpush1.msra.mxu0 %v526
        %952 = vmatprep.subr.mxu0 %v529
        %953 = vmatpush1.msra.mxu0 %v528
        %954 = vmatprep.subr.mxu0 %v531
        %955 = vmatpush1.msra.mxu0 %v530
        %956 = vmatprep.subr.mxu0 %v533
        %957 = vmatpush1.msra.mxu0 %v532
        %958 = vmatprep.subr.mxu0 %v535
        %959 = vmatpush1.msra.mxu0 %v534
        %960 = vmatprep.subr.mxu0 %v537
        %961 = vmatpush1.msra.mxu0 %v536
        %962 = vmatprep.subr.mxu0 %v539
        %963 = vmatpush1.msra.mxu0 %v538
        %964 = vmatprep.subr.mxu0 %v541
        %965 = vmatpush1.msra.mxu0 %v540
        %966 = vmatprep.subr.mxu0 %v543
        %967 = vmatpush1.msra.mxu0 %v542
        %968 = vmatprep.subr.mxu0 %v545
        %969 = vmatpush1.msra.mxu0 %v544
        %970 = vmatprep.mubr.f32.mxu0 %v223
        %971 = vmatmul.mubr.f32.gmra.mrb[0].mxu0 %v222
        %v972 = vpop.f32.mrb[0].mxu0
        %v973 = vadd.f32 %v902, %v972
        %v974 = vpop.f32.mrb[0].mxu0
        %v975 = vadd.f32 %v904, %v974
        %976 = vdwg.mxu0
        %977 = vmatprep.subr.mxu0 %v547
        %978 = vmatpush1.msra.mxu0 %v546
        %979 = vmatprep.subr.mxu0 %v549
        %980 = vmatpush1.msra.mxu0 %v548
        %981 = vmatprep.subr.mxu0 %v551
        %982 = vmatpush1.msra.mxu0 %v550
        %983 = vmatprep.subr.mxu0 %v553
        %984 = vmatpush1.msra.mxu0 %v552
        %985 = vmatprep.subr.mxu0 %v555
        %986 = vmatpush1.msra.mxu0 %v554
        %987 = vmatprep.subr.mxu0 %v557
        %988 = vmatpush1.msra.mxu0 %v556
        %989 = vmatprep.subr.mxu0 %v559
        %990 = vmatpush1.msra.mxu0 %v558
        %991 = vmatprep.subr.mxu0 %v561
        %992 = vmatpush1.msra.mxu0 %v560
        %993 = vmatprep.subr.mxu0 %v563
        %994 = vmatpush1.msra.mxu0 %v562
        %995 = vmatprep.subr.mxu0 %v565
        %996 = vmatpush1.msra.mxu0 %v564
        %997 = vmatprep.subr.mxu0 %v567
        %998 = vmatpush1.msra.mxu0 %v566
        %999 = vmatprep.subr.mxu0 %v569
        %1000 = vmatpush1.msra.mxu0 %v568
        %1001 = vmatprep.subr.mxu0 %v571
        %1002 = vmatpush1.msra.mxu0 %v570
        %1003 = vmatprep.subr.mxu0 %v573
        %1004 = vmatpush1.msra.mxu0 %v572
        %1005 = vmatprep.subr.mxu0 %v575
        %1006 = vmatpush1.msra.mxu0 %v574
        %1007 = vmatprep.subr.mxu0 %v577
        %1008 = vmatpush1.msra.mxu0 %v576
        %1009 = vmatprep.subr.mxu0 %v579
        %1010 = vmatpush1.msra.mxu0 %v578
        %1011 = vmatprep.subr.mxu0 %v581
        %1012 = vmatpush1.msra.mxu0 %v580
        %1013 = vmatprep.subr.mxu0 %v583
        %1014 = vmatpush1.msra.mxu0 %v582
        %1015 = vmatprep.subr.mxu0 %v585
        %1016 = vmatpush1.msra.mxu0 %v584
        %1017 = vmatprep.subr.mxu0 %v587
        %1018 = vmatpush1.msra.mxu0 %v586
        %1019 = vmatprep.subr.mxu0 %v589
        %1020 = vmatpush1.msra.mxu0 %v588
        %1021 = vmatprep.subr.mxu0 %v591
        %1022 = vmatpush1.msra.mxu0 %v590
        %1023 = vmatprep.subr.mxu0 %v593
        %1024 = vmatpush1.msra.mxu0 %v592
        %1025 = vmatprep.subr.mxu0 %v595
        %1026 = vmatpush1.msra.mxu0 %v594
        %1027 = vmatprep.subr.mxu0 %v597
        %1028 = vmatpush1.msra.mxu0 %v596
        %1029 = vmatprep.subr.mxu0 %v599
        %1030 = vmatpush1.msra.mxu0 %v598
        %1031 = vmatprep.subr.mxu0 %v601
        %1032 = vmatpush1.msra.mxu0 %v600
        %1033 = vmatprep.subr.mxu0 %v603
        %1034 = vmatpush1.msra.mxu0 %v602
        %1035 = vmatprep.subr.mxu0 %v605
        %1036 = vmatpush1.msra.mxu0 %v604
        %1037 = vmatprep.subr.mxu0 %v607
        %1038 = vmatpush1.msra.mxu0 %v606
        %1039 = vmatprep.subr.mxu0 %v609
        %1040 = vmatpush1.msra.mxu0 %v608
        %1041 = vmatprep.mubr.f32.mxu0 %v225
        %1042 = vmatmul.mubr.f32.gmra.mrb[0].mxu0 %v224
        %v1043 = vpop.f32.mrb[0].mxu0
        %v1044 = vadd.f32 %v973, %v1043
        %v1045 = vpop.f32.mrb[0].mxu0
        %v1046 = vadd.f32 %v975, %v1045
        %1047 = vdwg.mxu0
        %1048 = vst [vmem:[%s213] sm:$0xff] %v1044
        %1049 = vst [vmem:[%s213 + $0x8] sm:$0xff] %v1046
        %s1050 = sand.u32 %s97, 1
        %s1051 = scalar_lea.sflag [#allocation4], %s1050
        %s1052 = sand.u32 %s97, 1
        %s1053 = smul.addr %s1052, 16
        %s1054 = scalar_lea.vmem [#allocation8], %s1053
        // Predicated region
        $region45: #{tpu_custom_call.1} parent=31 // pred_check
          %p1055 = pneg %p107
        $region46: #{tpu_custom_call.1} parent=31 // pred_check_branch
          %1057 = sbr.rel (%p1055) target = $region48
        $region47: #{tpu_custom_call.1} parent=31 // pred_region
          %s1059 = ssub.s32 256, 256
          %1060 = vsyncadd %s1051, %s1059
          %s1061 = smul.addr %s21, 2
          %s1062 = smul.addr %s1061, 128
          %s1063 = scalar_lea.hbm %s3, %s1062
          %s1065 = sshll.u32 %s1054, 4
          %s1066 = int_to_ptr.vmem [resolvable:$true] %s1065
          %1068 = dma.vmem_to_hbm [thread:$0]  %s1066, 256, %s1063, %s1051
        $region48: #{tpu_custom_call.1} parent=31 // pred_fallthru
          _
      $region32: #{tpu_custom_call.1} parent=5 // pred_fallthru
        _
      %p1069 = scmp.le.s32.totalorder 2, %s16
      // Predicated region
      $region49: #{tpu_custom_call.1} parent=5 // pred_check
        %p1070 = pneg %p1069
      $region50: #{tpu_custom_call.1} parent=5 // pred_check_branch
        %1072 = sbr.rel (%p1070) target = $region52
      $region51: #{tpu_custom_call.1} parent=5 // pred_region
        %s1073 = ssub.s32 %s16, 2
        // Predicated region
        $region53: #{tpu_custom_call.1} parent=51 // pred_check
          %p1074 = pneg %p113
        $region54: #{tpu_custom_call.1} parent=51 // pred_check_branch
          %1076 = sbr.rel (%p1074) target = $region56
        $region55: #{tpu_custom_call.1} parent=51 // pred_region
          %s1077 = sand.u32 %s98, 1
          %s1078 = scalar_lea.sflag [#allocation4], %s1077
          %s1079 = sand.u32 %s98, 1
          %s1080 = smul.addr %s1079, 16
          %s1081 = scalar_lea.vmem [#allocation8], %s1080
          %1082 = dma.done %s1078, 256
        $region56: #{tpu_custom_call.1} parent=51 // pred_fallthru
          _
      $region52: #{tpu_custom_call.1} parent=5 // pred_fallthru
        _
    $region6: #{tpu_custom_call.1} parent=1 // loop_footer
      %s20 = sadd.s32 1, %s16
    $region7: #{tpu_custom_call.1} parent=1 // loop_footer_branch
      %15 = sbr.rel target = $region3
    $region8: #{tpu_custom_call.1} parent=1 // loop_exit
      _
    %1083 = vsyncpa [#allocation3], 1
    %s1084 = scalar_lea.sflag [#allocation3], 1
    %1085 = vsyncpa %s1084, 1
    %1086 = vsyncpa [#allocation6], 1
    %1087 = vsyncpa [#allocation4], 1
    %s1088 = scalar_lea.sflag [#allocation4], 1
    %1089 = vsyncpa %s1088, 1

</llo_original>
